<compile_context>
chip_gen: v5e
topology: v5e:2x2
jax: 0.10.0
libtpu: 0.0.40
codegen_flags: <defaults>
</compile_context>

<pallas_src>
import math

import jax
import jax.numpy as jnp
from jax.experimental import pallas as pl
from jax.experimental.pallas import tpu as pltpu


_LANE = 128
_HIDDEN_CHUNK = 256  # lanes of the hidden axis processed per inner step


def _round_up(x, m):
    return ((x + m - 1) // m) * m


def _mlp_kernel(x_ref, w1_ref, b1_ref, w2p_ref, b2p_ref, o_ref):
    # x:   (tb, 2)      f32   batch tile
    # w1:  (2, Hpad)    f32   (in_features, hidden), hidden zero-padded
    # b1:  (1, Hpad)    f32
    # w2p: (Hpad, 128)  f32   w2 zero-padded on both axes (lane-dense output)
    # b2p: (1, 128)     f32   b2 zero-padded
    # o:   (tb, 128)    f32   columns [0:2] hold the real outputs
    x = x_ref[...]
    x0 = x[:, 0:1]
    x1 = x[:, 1:2]

    tb = x.shape[0]
    hpad = w1_ref.shape[1]
    npad = w2p_ref.shape[1]
    chunk = _HIDDEN_CHUNK if hpad % _HIDDEN_CHUNK == 0 else _LANE
    n_chunks = hpad // chunk

    # Hidden axis in chunks: layer-1 K=2 contraction as two VPU broadcast-FMAs
    # (no MXU padding waste), tanh on the EUP, then a partial MXU matmul into
    # a lane-dense f32 accumulator.  Padded hidden columns are tanh(0)=0 and
    # meet zero rows of w2p, so the math is exact.
    # TODO(synk): on v6e/v7x, casting h (and w2p) to bf16 before tanh/dot ~2x
    # the binding EUP slot, at the cost of ~4e-3 relative error.
    acc = jnp.zeros((tb, npad), jnp.float32)
    for c in range(n_chunks):          # static trip count (Hpad / chunk)
        lo = c * chunk
        hi = lo + chunk
        w1c = w1_ref[:, lo:hi]                                   # (2, chunk)
        h = x0 * w1c[0:1, :] + x1 * w1c[1:2, :] + b1_ref[:, lo:hi]
        h = jnp.tanh(h)                                          # (tb, chunk)
        acc = acc + jnp.dot(h, w2p_ref[lo:hi, :],
                            preferred_element_type=jnp.float32)  # MXU

    o_ref[...] = (acc + b2p_ref[...]).astype(o_ref.dtype)


def prepare_params(w1, b1, w2, b2):
    """One-time weight padding/layout (hoisted out of the forward call path).

    w1: (2, H), b1: (1, H), w2: (H, 2), b2: (1, 2).
    """
    in_dim, H = w1.shape
    out_dim = w2.shape[1]
    hpad = _round_up(H, _LANE)          # 1000 -> 1024
    npad = _LANE                        # 2 -> 128 (lane-dense output)
    w1p = jnp.pad(w1, ((0, 0), (0, hpad - H)))
    b1p = jnp.pad(b1, ((0, 0), (0, hpad - H)))
    w2p = jnp.pad(w2, ((0, hpad - H), (0, npad - out_dim)))
    b2p = jnp.pad(b2, ((0, 0), (0, npad - out_dim)))
    return (w1p, b1p, w2p, b2p, out_dim)


def mlp_forward(x, prepared, *, block_b=1024):
    """Fused forward pass.  x: (B, 2) f32, prepared = prepare_params(...)."""
    w1p, b1p, w2p, b2p, out_dim = prepared
    B, in_dim = x.shape
    hpad = w1p.shape[1]
    npad = w2p.shape[1]

    # Batch tile: sublane-aligned; mid-sized batches get >= 2 grid steps so the
    # "parallel" grid axis can fan out over both v7x TensorCores.
    tb = max(8, min(block_b, _round_up(pl.cdiv(B, 2), 8)))
    bpad = _round_up(B, tb)
    grid = (bpad // tb,)
    xp = jnp.pad(x, ((0, bpad - B), (0, 0))) if bpad != B else x

    nbytes = 4  # f32
    cost = pl.CostEstimate(
        flops=2 * bpad * hpad * (in_dim + npad),
        transcendentals=bpad * hpad,
        bytes_accessed=nbytes * (xp.size + bpad * npad + w1p.size
                                 + b1p.size + w2p.size + b2p.size),
    )

    out = pl.pallas_call(
        _mlp_kernel,
        out_shape=jax.ShapeDtypeStruct((bpad, npad), x.dtype),
        grid=grid,
        in_specs=[
            pl.BlockSpec((tb, in_dim), lambda i: (i, 0)),     # x: streamed
            pl.BlockSpec((in_dim, hpad), lambda i: (0, 0)),   # w1: resident
            pl.BlockSpec((1, hpad), lambda i: (0, 0)),        # b1: resident
            pl.BlockSpec((hpad, npad), lambda i: (0, 0)),     # w2p: resident
            pl.BlockSpec((1, npad), lambda i: (0, 0)),        # b2p: resident
        ],
        out_specs=pl.BlockSpec((tb, npad), lambda i: (i, 0)),
        compiler_params=pltpu.CompilerParams(
            dimension_semantics=("parallel",)),
        cost_estimate=cost,
    )(xp, w1p, b1p, w2p, b2p)

    # Drop batch padding rows and the zero-padded output lanes.
    return out[:B, :out_dim]


def init_params(key):
    """Matches nn.Linear default init U(-1/sqrt(fan_in), 1/sqrt(fan_in))."""
    k1, k2, k3, k4 = jax.random.split(key, 4)
    in1, out1 = 2, 1000
    in2, out2 = 1000, 2
    bound1 = 1.0 / math.sqrt(in1)
    bound2 = 1.0 / math.sqrt(in2)
    # Stored pre-transposed relative to torch: (in_features, out_features)
    w1 = jax.random.uniform(k1, (in1, out1), jnp.float32, -bound1, bound1)
    b1 = jax.random.uniform(k2, (1, out1), jnp.float32, -bound1, bound1)
    w2 = jax.random.uniform(k3, (in2, out2), jnp.float32, -bound2, bound2)
    b2 = jax.random.uniform(k4, (1, out2), jnp.float32, -bound2, bound2)
    return w1, b1, w2, b2


if __name__ == "__main__":
    key = jax.random.PRNGKey(0)
    pkey, xkey = jax.random.split(key)
    w1, b1, w2, b2 = init_params(pkey)
    prepared = prepare_params(w1, b1, w2, b2)   # one-time padding/layout

    batch = 8
    x = jax.random.normal(xkey, (batch, 2), jnp.float32)

    out = mlp_forward(x, prepared)
    jax.block_until_ready(out)

    # Reference in plain JAX with f32-exact matmuls (same math as the PyTorch
    # forward: tanh(x @ W1^T + b1) @ W2^T + b2, weights here pre-transposed).
    hp = jax.lax.Precision.HIGHEST
    ref = jnp.dot(jnp.tanh(jnp.dot(x, w1, precision=hp) + b1),
                  w2, precision=hp) + b2
    assert out.shape == (batch, 2)
    assert jnp.allclose(out, ref, atol=5e-4, rtol=5e-4), (
        float(jnp.max(jnp.abs(out - ref))))

    print("KERNEL_OK")
</pallas_src>

<mosaic_0001>
module attributes {stable_mosaic.version = 11 : i64} {
  func.func @_mlp_kernel(%arg0: i32, %arg1: memref<8x2xf32, #tpu.memory_space<vmem>>, %arg2: memref<2x1024xf32, #tpu.memory_space<vmem>>, %arg3: memref<1x1024xf32, #tpu.memory_space<vmem>>, %arg4: memref<1024x128xf32, #tpu.memory_space<vmem>>, %arg5: memref<1x128xf32, #tpu.memory_space<vmem>>, %arg6: memref<8x128xf32, #tpu.memory_space<vmem>>) attributes {dimension_semantics = [#tpu.dimension_semantics<parallel>], iteration_bounds = array<i64: 1>, scalar_prefetch = 0 : i64, scratch_operands = 0 : i64, tpu.core_type = #tpu.core_type<tc>, window_params = [{transform_indices = @transform_0, window_bounds = array<i64: 8, 2>}, {pipeline_mode = #tpu.pipeline_mode<synchronous>, transform_indices = @transform_1, window_bounds = array<i64: 2, 1024>}, {pipeline_mode = #tpu.pipeline_mode<synchronous>, transform_indices = @transform_2, window_bounds = array<i64: 1, 1024>}, {pipeline_mode = #tpu.pipeline_mode<synchronous>, transform_indices = @transform_3, window_bounds = array<i64: 1024, 128>}, {pipeline_mode = #tpu.pipeline_mode<synchronous>, transform_indices = @transform_4, window_bounds = array<i64: 1, 128>}, {transform_indices = @transform_5, window_bounds = array<i64: 8, 128>}]} {
    %c0 = arith.constant 0 : index
    %c0_0 = arith.constant 0 : index
    %0 = vector.load %arg1[%c0, %c0_0] : memref<8x2xf32, #tpu.memory_space<vmem>>, vector<8x2xf32>
    %1 = vector.extract_strided_slice %0 {offsets = [0, 0], sizes = [8, 1], strides = [1, 1]} : vector<8x2xf32> to vector<8x1xf32>
    %2 = vector.extract_strided_slice %0 {offsets = [0, 1], sizes = [8, 1], strides = [1, 1]} : vector<8x2xf32> to vector<8x1xf32>
    %cst = arith.constant 0.000000e+00 : f32
    %3 = vector.broadcast %cst : f32 to vector<8x128xf32>
    %c0_1 = arith.constant 0 : index
    %c0_2 = arith.constant 0 : index
    %4 = vector.load %arg2[%c0_1, %c0_2] : memref<2x1024xf32, #tpu.memory_space<vmem>>, vector<2x256xf32>
    %5 = vector.extract_strided_slice %4 {offsets = [0, 0], sizes = [1, 256], strides = [1, 1]} : vector<2x256xf32> to vector<1x256xf32>
    %6 = vector.broadcast %1 : vector<8x1xf32> to vector<8x256xf32>
    %7 = vector.broadcast %5 : vector<1x256xf32> to vector<8x256xf32>
    %8 = arith.mulf %6, %7 : vector<8x256xf32>
    %9 = vector.extract_strided_slice %4 {offsets = [1, 0], sizes = [1, 256], strides = [1, 1]} : vector<2x256xf32> to vector<1x256xf32>
    %10 = vector.broadcast %2 : vector<8x1xf32> to vector<8x256xf32>
    %11 = vector.broadcast %9 : vector<1x256xf32> to vector<8x256xf32>
    %12 = arith.mulf %10, %11 : vector<8x256xf32>
    %13 = arith.addf %8, %12 : vector<8x256xf32>
    %c0_3 = arith.constant 0 : index
    %c0_4 = arith.constant 0 : index
    %14 = vector.load %arg3[%c0_3, %c0_4] : memref<1x1024xf32, #tpu.memory_space<vmem>>, vector<1x256xf32>
    %15 = vector.broadcast %14 : vector<1x256xf32> to vector<8x256xf32>
    %16 = arith.addf %13, %15 : vector<8x256xf32>
    %17 = math.tanh %16 : vector<8x256xf32>
    %c0_5 = arith.constant 0 : index
    %c0_6 = arith.constant 0 : index
    %18 = vector.load %arg4[%c0_5, %c0_6] : memref<1024x128xf32, #tpu.memory_space<vmem>>, vector<256x128xf32>
    %cst_7 = arith.constant dense<0.000000e+00> : vector<8x128xf32>
    %19 = tpu.matmul %17, %18, %cst_7 {dimension_numbers = #tpu.dot_dimension_numbers<[1], [0], [0], [1], [0, 0, 1, 1], [], []>} : vector<8x256xf32>, vector<256x128xf32>, vector<8x128xf32> -> vector<8x128xf32>
    %20 = arith.addf %3, %19 : vector<8x128xf32>
    %c0_8 = arith.constant 0 : index
    %c256 = arith.constant 256 : index
    %21 = vector.load %arg2[%c0_8, %c256] : memref<2x1024xf32, #tpu.memory_space<vmem>>, vector<2x256xf32>
    %22 = vector.extract_strided_slice %21 {offsets = [0, 0], sizes = [1, 256], strides = [1, 1]} : vector<2x256xf32> to vector<1x256xf32>
    %23 = vector.broadcast %1 : vector<8x1xf32> to vector<8x256xf32>
    %24 = vector.broadcast %22 : vector<1x256xf32> to vector<8x256xf32>
    %25 = arith.mulf %23, %24 : vector<8x256xf32>
    %26 = vector.extract_strided_slice %21 {offsets = [1, 0], sizes = [1, 256], strides = [1, 1]} : vector<2x256xf32> to vector<1x256xf32>
    %27 = vector.broadcast %2 : vector<8x1xf32> to vector<8x256xf32>
    %28 = vector.broadcast %26 : vector<1x256xf32> to vector<8x256xf32>
    %29 = arith.mulf %27, %28 : vector<8x256xf32>
    %30 = arith.addf %25, %29 : vector<8x256xf32>
    %c0_9 = arith.constant 0 : index
    %c256_10 = arith.constant 256 : index
    %31 = vector.load %arg3[%c0_9, %c256_10] : memref<1x1024xf32, #tpu.memory_space<vmem>>, vector<1x256xf32>
    %32 = vector.broadcast %31 : vector<1x256xf32> to vector<8x256xf32>
    %33 = arith.addf %30, %32 : vector<8x256xf32>
    %34 = math.tanh %33 : vector<8x256xf32>
    %c256_11 = arith.constant 256 : index
    %c0_12 = arith.constant 0 : index
    %35 = vector.load %arg4[%c256_11, %c0_12] : memref<1024x128xf32, #tpu.memory_space<vmem>>, vector<256x128xf32>
    %cst_13 = arith.constant dense<0.000000e+00> : vector<8x128xf32>
    %36 = tpu.matmul %34, %35, %cst_13 {dimension_numbers = #tpu.dot_dimension_numbers<[1], [0], [0], [1], [0, 0, 1, 1], [], []>} : vector<8x256xf32>, vector<256x128xf32>, vector<8x128xf32> -> vector<8x128xf32>
    %37 = arith.addf %20, %36 : vector<8x128xf32>
    %c0_14 = arith.constant 0 : index
    %c512 = arith.constant 512 : index
    %38 = vector.load %arg2[%c0_14, %c512] : memref<2x1024xf32, #tpu.memory_space<vmem>>, vector<2x256xf32>
    %39 = vector.extract_strided_slice %38 {offsets = [0, 0], sizes = [1, 256], strides = [1, 1]} : vector<2x256xf32> to vector<1x256xf32>
    %40 = vector.broadcast %1 : vector<8x1xf32> to vector<8x256xf32>
    %41 = vector.broadcast %39 : vector<1x256xf32> to vector<8x256xf32>
    %42 = arith.mulf %40, %41 : vector<8x256xf32>
    %43 = vector.extract_strided_slice %38 {offsets = [1, 0], sizes = [1, 256], strides = [1, 1]} : vector<2x256xf32> to vector<1x256xf32>
    %44 = vector.broadcast %2 : vector<8x1xf32> to vector<8x256xf32>
    %45 = vector.broadcast %43 : vector<1x256xf32> to vector<8x256xf32>
    %46 = arith.mulf %44, %45 : vector<8x256xf32>
    %47 = arith.addf %42, %46 : vector<8x256xf32>
    %c0_15 = arith.constant 0 : index
    %c512_16 = arith.constant 512 : index
    %48 = vector.load %arg3[%c0_15, %c512_16] : memref<1x1024xf32, #tpu.memory_space<vmem>>, vector<1x256xf32>
    %49 = vector.broadcast %48 : vector<1x256xf32> to vector<8x256xf32>
    %50 = arith.addf %47, %49 : vector<8x256xf32>
    %51 = math.tanh %50 : vector<8x256xf32>
    %c512_17 = arith.constant 512 : index
    %c0_18 = arith.constant 0 : index
    %52 = vector.load %arg4[%c512_17, %c0_18] : memref<1024x128xf32, #tpu.memory_space<vmem>>, vector<256x128xf32>
    %cst_19 = arith.constant dense<0.000000e+00> : vector<8x128xf32>
    %53 = tpu.matmul %51, %52, %cst_19 {dimension_numbers = #tpu.dot_dimension_numbers<[1], [0], [0], [1], [0, 0, 1, 1], [], []>} : vector<8x256xf32>, vector<256x128xf32>, vector<8x128xf32> -> vector<8x128xf32>
    %54 = arith.addf %37, %53 : vector<8x128xf32>
    %c0_20 = arith.constant 0 : index
    %c768 = arith.constant 768 : index
    %55 = vector.load %arg2[%c0_20, %c768] : memref<2x1024xf32, #tpu.memory_space<vmem>>, vector<2x256xf32>
    %56 = vector.extract_strided_slice %55 {offsets = [0, 0], sizes = [1, 256], strides = [1, 1]} : vector<2x256xf32> to vector<1x256xf32>
    %57 = vector.broadcast %1 : vector<8x1xf32> to vector<8x256xf32>
    %58 = vector.broadcast %56 : vector<1x256xf32> to vector<8x256xf32>
    %59 = arith.mulf %57, %58 : vector<8x256xf32>
    %60 = vector.extract_strided_slice %55 {offsets = [1, 0], sizes = [1, 256], strides = [1, 1]} : vector<2x256xf32> to vector<1x256xf32>
    %61 = vector.broadcast %2 : vector<8x1xf32> to vector<8x256xf32>
    %62 = vector.broadcast %60 : vector<1x256xf32> to vector<8x256xf32>
    %63 = arith.mulf %61, %62 : vector<8x256xf32>
    %64 = arith.addf %59, %63 : vector<8x256xf32>
    %c0_21 = arith.constant 0 : index
    %c768_22 = arith.constant 768 : index
    %65 = vector.load %arg3[%c0_21, %c768_22] : memref<1x1024xf32, #tpu.memory_space<vmem>>, vector<1x256xf32>
    %66 = vector.broadcast %65 : vector<1x256xf32> to vector<8x256xf32>
    %67 = arith.addf %64, %66 : vector<8x256xf32>
    %68 = math.tanh %67 : vector<8x256xf32>
    %c768_23 = arith.constant 768 : index
    %c0_24 = arith.constant 0 : index
    %69 = vector.load %arg4[%c768_23, %c0_24] : memref<1024x128xf32, #tpu.memory_space<vmem>>, vector<256x128xf32>
    %cst_25 = arith.constant dense<0.000000e+00> : vector<8x128xf32>
    %70 = tpu.matmul %68, %69, %cst_25 {dimension_numbers = #tpu.dot_dimension_numbers<[1], [0], [0], [1], [0, 0, 1, 1], [], []>} : vector<8x256xf32>, vector<256x128xf32>, vector<8x128xf32> -> vector<8x128xf32>
    %71 = arith.addf %54, %70 : vector<8x128xf32>
    %c0_26 = arith.constant 0 : index
    %c0_27 = arith.constant 0 : index
    %72 = vector.load %arg5[%c0_26, %c0_27] : memref<1x128xf32, #tpu.memory_space<vmem>>, vector<1x128xf32>
    %73 = vector.broadcast %72 : vector<1x128xf32> to vector<8x128xf32>
    %74 = arith.addf %71, %73 : vector<8x128xf32>
    %c0_28 = arith.constant 0 : index
    %c0_29 = arith.constant 0 : index
    %75 = vector.load %arg6[%c0_28, %c0_29] : memref<8x128xf32, #tpu.memory_space<vmem>>, vector<8x128xf32>
    tpu.vector_store %arg6[%c0_28, %c0_29], %74 {strides = array<i32>} : memref<8x128xf32, #tpu.memory_space<vmem>>, vector<8x128xf32>,
    return
  }
  func.func @transform_0(%arg0: i32) -> (i32, i32) {
    %c0_i32 = arith.constant 0 : i32
    %c0_i32_0 = arith.constant 0 : i32
    return %arg0, %c0_i32 : i32, i32
  }
  func.func @transform_1(%arg0: i32) -> (i32, i32) {
    %c0_i32 = arith.constant 0 : i32
    %c0_i32_0 = arith.constant 0 : i32
    %c0_i32_1 = arith.constant 0 : i32
    return %c0_i32, %c0_i32_0 : i32, i32
  }
  func.func @transform_2(%arg0: i32) -> (i32, i32) {
    %c0_i32 = arith.constant 0 : i32
    %c0_i32_0 = arith.constant 0 : i32
    %c0_i32_1 = arith.constant 0 : i32
    return %c0_i32, %c0_i32_0 : i32, i32
  }
  func.func @transform_3(%arg0: i32) -> (i32, i32) {
    %c0_i32 = arith.constant 0 : i32
    %c0_i32_0 = arith.constant 0 : i32
    %c0_i32_1 = arith.constant 0 : i32
    return %c0_i32, %c0_i32_0 : i32, i32
  }
  func.func @transform_4(%arg0: i32) -> (i32, i32) {
    %c0_i32 = arith.constant 0 : i32
    %c0_i32_0 = arith.constant 0 : i32
    %c0_i32_1 = arith.constant 0 : i32
    return %c0_i32, %c0_i32_0 : i32, i32
  }
  func.func @transform_5(%arg0: i32) -> (i32, i32) {
    %c0_i32 = arith.constant 0 : i32
    %c0_i32_0 = arith.constant 0 : i32
    return %arg0, %c0_i32 : i32, i32
  }
}

</mosaic_0001>

<llo_original>
// kernel: tpu_custom_call.1
$region0: #{tpu_custom_call.1}
  #allocation0 [shape = 'u32[]', space=smem, size = 0x4, offset = 0x4, fixed_abs, tag = 'smem constant byte address 0x4 - core index']
  #allocation1 [shape = 'u32[72,128]{1,0:T(1,128)}', space=vmem, size = 0x9000, scoped, tag = 'internal scratch']
  %s0 = inlined_call_operand.vmem [shape: f32[8,2], index: 0, kind: input, shape index: {}]
  %s1 = inlined_call_operand.hbm [shape: f32[2,1024], index: 1, kind: input, shape index: {}]
  %s2 = inlined_call_operand.vmem [shape: f32[1,1024], index: 2, kind: input, shape index: {}]
  %s3 = inlined_call_operand.hbm [shape: f32[1024,128], index: 3, kind: input, shape index: {}]
  %s4 = inlined_call_operand.vmem [shape: f32[1,128], index: 4, kind: input, shape index: {}]
  %s5 = inlined_call_operand.hbm [shape: f32[8,128], index: 5, kind: output, shape index: {}]
  %s6 = sld [smem:[#allocation0]]
  $region38: #{tpu_custom_call.1} parent=0
    _
  %s8 = ssub.s32 1, %s6
  %s9 = scalar_select 0, %s8, %s6
  $region1: #{tpu_custom_call.1} parent=0
    #allocation2 [shape = 'u8[8192]{0}', space=vmem, size = 0x2000, scoped, tag = 'input window, operand 1, single buffered']
    #allocation3 [shape = 's32[1]{0}', space=sflag, size = 0x4, scoped, tag = 'scoped memory for tpu_custom_call.1']
    #allocation4 [shape = 's32[1]{0}', space=sflag, size = 0x4, scoped, tag = 'scoped memory for tpu_custom_call.1']
    #allocation5 [shape = 'u8[524288]{0}', space=vmem, size = 0x80000, scoped, tag = 'input window, operand 3, single buffered']
    #allocation6 [shape = 's32[1]{0}', space=sflag, size = 0x4, scoped, tag = 'scoped memory for tpu_custom_call.1']
    #allocation7 [shape = 'u8[4096]{0}', space=vmem, size = 0x1000, scoped, tag = 'output window, operand 0, single buffered']
    %10 = vsyncpa [#allocation3], 0
    %11 = vsyncpa [#allocation6], 0
    %12 = vsyncpa [#allocation4], 0
    // Predicated region
    $region2: #{tpu_custom_call.1} parent=1 // pred_check
      _
    $region3: #{tpu_custom_call.1} parent=1 // pred_check_branch
      %14 = sbr.rel (0) target = $region5
    $region4: #{tpu_custom_call.1} parent=1 // pred_region
      _
    $region5: #{tpu_custom_call.1} parent=1 // pred_fallthru
      _
    // Predicated region
    $region6: #{tpu_custom_call.1} parent=1 // pred_check
      _
    $region7: #{tpu_custom_call.1} parent=1 // pred_check_branch
      %16 = sbr.rel (0) target = $region9
    $region8: #{tpu_custom_call.1} parent=1 // pred_region
      %18 = vsyncadd [#allocation3], 0
      %s20 = sshll.u32 %s1, 4
      %s21 = int_to_ptr.hbm [resolvable:$true] %s20
      %s22 = sshll.u32 [#allocation2], 4
      %s23 = int_to_ptr.vmem [resolvable:$true] %s22
      %25 = dma.hbm_to_vmem [thread:$0]  %s21, 256, %s23, [#allocation3]
    $region9: #{tpu_custom_call.1} parent=1 // pred_fallthru
      _
    // Predicated region
    $region10: #{tpu_custom_call.1} parent=1 // pred_check
      _
    $region11: #{tpu_custom_call.1} parent=1 // pred_check_branch
      %27 = sbr.rel (0) target = $region13
    $region12: #{tpu_custom_call.1} parent=1 // pred_region
      _
    $region13: #{tpu_custom_call.1} parent=1 // pred_fallthru
      _
    // Predicated region
    $region14: #{tpu_custom_call.1} parent=1 // pred_check
      _
    $region15: #{tpu_custom_call.1} parent=1 // pred_check_branch
      %29 = sbr.rel (0) target = $region17
    $region16: #{tpu_custom_call.1} parent=1 // pred_region
      %31 = vsyncadd [#allocation6], 0
      %s32 = sshll.u32 %s3, 4
      %s33 = int_to_ptr.hbm [resolvable:$true] %s32
      %s34 = sshll.u32 [#allocation5], 4
      %s35 = int_to_ptr.vmem [resolvable:$true] %s34
      %40 = dma.hbm_to_vmem [thread:$0]  %s33, 16384, %s35, [#allocation6], 128, 128, 8
    $region17: #{tpu_custom_call.1} parent=1 // pred_fallthru
      _
    // Predicated region
    $region18: #{tpu_custom_call.1} parent=1 // pred_check
      _
    $region19: #{tpu_custom_call.1} parent=1 // pred_check_branch
      %42 = sbr.rel (0) target = $region21
    $region20: #{tpu_custom_call.1} parent=1 // pred_region
      _
    $region21: #{tpu_custom_call.1} parent=1 // pred_fallthru
      _
    // Predicated region
    $region22: #{tpu_custom_call.1} parent=1 // pred_check
      _
    $region23: #{tpu_custom_call.1} parent=1 // pred_check_branch
      %44 = sbr.rel (0) target = $region25
    $region24: #{tpu_custom_call.1} parent=1 // pred_region
      %46 = dma.done [#allocation3], 256
    $region25: #{tpu_custom_call.1} parent=1 // pred_fallthru
      _
    // Predicated region
    $region26: #{tpu_custom_call.1} parent=1 // pred_check
      _
    $region27: #{tpu_custom_call.1} parent=1 // pred_check_branch
      %48 = sbr.rel (0) target = $region29
    $region28: #{tpu_custom_call.1} parent=1 // pred_region
      %50 = dma.done [#allocation6], 16384
    $region29: #{tpu_custom_call.1} parent=1 // pred_fallthru
      _
    %v51 = vld [vmem:[%s0] sm:$0xff]
    %v52 = vld [vmem:[#allocation2] sm:$0xf]
    %54 = vset.pattern.permute.xlu0 0
    %55 = vperm.xlu0 %54, %v51
    %v56 = vpop.permute.xlu0 %55
    %v59 = vperm.slane %v52, 0
    %v60 = vperm.slane %v52, 2
    %v63 = vperm.slane %v59, 0
    %v64 = vperm.slane %v60, 0
    %v65 = vmul.f32 %v56, %v63
    %v66 = vmul.f32 %v56, %v64
    %67 = vset.pattern.permute.xlu0 1
    %68 = vperm.xlu0 %67, %v51
    %v69 = vpop.permute.xlu0 %68
    %v71 = vperm.slane %v52, 1
    %v72 = vperm.slane %v52, 3
    %v75 = vperm.slane %v71, 1
    %v76 = vperm.slane %v72, 1
    %v77 = vmul.f32 %v69, %v75
    %v78 = vmul.f32 %v69, %v76
    %v79 = vadd.f32 %v65, %v77
    %v80 = vadd.f32 %v66, %v78
    %v81 = vld [vmem:[%s2] sm:$0x3]
    %v83 = vperm.slane %v81, 0
    %v84 = vperm.slane %v81, 1
    %v87 = vadd.f32 %v79, %v83
    %v88 = vadd.f32 %v80, %v84
    %v89 = vtanh.pop %v87
    %v90 = vtanh.pop %v88
    %v91 = vld [vmem:[#allocation5] sm:$0xff]
    %v92 = vld [vmem:[#allocation5 + $0x8] sm:$0xff]
    %v93 = vld [vmem:[#allocation5 + $0x10] sm:$0xff]
    %v94 = vld [vmem:[#allocation5 + $0x18] sm:$0xff]
    %v95 = vld [vmem:[#allocation5 + $0x20] sm:$0xff]
    %v96 = vld [vmem:[#allocation5 + $0x28] sm:$0xff]
    %v97 = vld [vmem:[#allocation5 + $0x30] sm:$0xff]
    %v98 = vld [vmem:[#allocation5 + $0x38] sm:$0xff]
    %v99 = vld [vmem:[#allocation5 + $0x40] sm:$0xff]
    %v100 = vld [vmem:[#allocation5 + $0x48] sm:$0xff]
    %v101 = vld [vmem:[#allocation5 + $0x50] sm:$0xff]
    %v102 = vld [vmem:[#allocation5 + $0x58] sm:$0xff]
    %v103 = vld [vmem:[#allocation5 + $0x60] sm:$0xff]
    %v104 = vld [vmem:[#allocation5 + $0x68] sm:$0xff]
    %v105 = vld [vmem:[#allocation5 + $0x70] sm:$0xff]
    %v106 = vld [vmem:[#allocation5 + $0x78] sm:$0xff]
    %v107 = vld [vmem:[#allocation5 + $0x80] sm:$0xff]
    %v108 = vld [vmem:[#allocation5 + $0x88] sm:$0xff]
    %v109 = vld [vmem:[#allocation5 + $0x90] sm:$0xff]
    %v110 = vld [vmem:[#allocation5 + $0x98] sm:$0xff]
    %v111 = vld [vmem:[#allocation5 + $0xa0] sm:$0xff]
    %v112 = vld [vmem:[#allocation5 + $0xa8] sm:$0xff]
    %v113 = vld [vmem:[#allocation5 + $0xb0] sm:$0xff]
    %v114 = vld [vmem:[#allocation5 + $0xb8] sm:$0xff]
    %v115 = vld [vmem:[#allocation5 + $0xc0] sm:$0xff]
    %v116 = vld [vmem:[#allocation5 + $0xc8] sm:$0xff]
    %v117 = vld [vmem:[#allocation5 + $0xd0] sm:$0xff]
    %v118 = vld [vmem:[#allocation5 + $0xd8] sm:$0xff]
    %v119 = vld [vmem:[#allocation5 + $0xe0] sm:$0xff]
    %v120 = vld [vmem:[#allocation5 + $0xe8] sm:$0xff]
    %v121 = vld [vmem:[#allocation5 + $0xf0] sm:$0xff]
    %v122 = vld [vmem:[#allocation5 + $0xf8] sm:$0xff]
    %v123 = vld [vmem:[#allocation2 + $0x4] sm:$0xf]
    %v125 = vperm.slane %v123, 0
    %v126 = vperm.slane %v123, 2
    %v129 = vperm.slane %v125, 0
    %v130 = vperm.slane %v126, 0
    %v131 = vmul.f32 %v56, %v129
    %v132 = vmul.f32 %v56, %v130
    %v133 = vperm.slane %v123, 1
    %v134 = vperm.slane %v123, 3
    %v137 = vperm.slane %v133, 1
    %v138 = vperm.slane %v134, 1
    %v139 = vmul.f32 %v69, %v137
    %v140 = vmul.f32 %v69, %v138
    %v141 = vadd.f32 %v131, %v139
    %v142 = vadd.f32 %v132, %v140
    %v143 = vld [vmem:[%s2 + $0x2] sm:$0x3]
    %v145 = vperm.slane %v143, 0
    %v146 = vperm.slane %v143, 1
    %v149 = vadd.f32 %v141, %v145
    %v150 = vadd.f32 %v142, %v146
    %v151 = vtanh.pop %v149
    %v152 = vtanh.pop %v150
    %v153 = vld [vmem:[#allocation5 + $0x100] sm:$0xff]
    %v154 = vld [vmem:[#allocation5 + $0x108] sm:$0xff]
    %v155 = vld [vmem:[#allocation5 + $0x110] sm:$0xff]
    %v156 = vld [vmem:[#allocation5 + $0x118] sm:$0xff]
    %v157 = vld [vmem:[#allocation5 + $0x120] sm:$0xff]
    %v158 = vld [vmem:[#allocation5 + $0x128] sm:$0xff]
    %v159 = vld [vmem:[#allocation5 + $0x130] sm:$0xff]
    %v160 = vld [vmem:[#allocation5 + $0x138] sm:$0xff]
    %v161 = vld [vmem:[#allocation5 + $0x140] sm:$0xff]
    %v162 = vld [vmem:[#allocation5 + $0x148] sm:$0xff]
    %v163 = vld [vmem:[#allocation5 + $0x150] sm:$0xff]
    %v164 = vld [vmem:[#allocation5 + $0x158] sm:$0xff]
    %v165 = vld [vmem:[#allocation5 + $0x160] sm:$0xff]
    %v166 = vld [vmem:[#allocation5 + $0x168] sm:$0xff]
    %v167 = vld [vmem:[#allocation5 + $0x170] sm:$0xff]
    %v168 = vld [vmem:[#allocation5 + $0x178] sm:$0xff]
    %v169 = vld [vmem:[#allocation5 + $0x180] sm:$0xff]
    %v170 = vld [vmem:[#allocation5 + $0x188] sm:$0xff]
    %v171 = vld [vmem:[#allocation5 + $0x190] sm:$0xff]
    %v172 = vld [vmem:[#allocation5 + $0x198] sm:$0xff]
    %v173 = vld [vmem:[#allocation5 + $0x1a0] sm:$0xff]
    %v174 = vld [vmem:[#allocation5 + $0x1a8] sm:$0xff]
    %v175 = vld [vmem:[#allocation5 + $0x1b0] sm:$0xff]
    %v176 = vld [vmem:[#allocation5 + $0x1b8] sm:$0xff]
    %v177 = vld [vmem:[#allocation5 + $0x1c0] sm:$0xff]
    %v178 = vld [vmem:[#allocation5 + $0x1c8] sm:$0xff]
    %v179 = vld [vmem:[#allocation5 + $0x1d0] sm:$0xff]
    %v180 = vld [vmem:[#allocation5 + $0x1d8] sm:$0xff]
    %v181 = vld [vmem:[#allocation5 + $0x1e0] sm:$0xff]
    %v182 = vld [vmem:[#allocation5 + $0x1e8] sm:$0xff]
    %v183 = vld [vmem:[#allocation5 + $0x1f0] sm:$0xff]
    %v184 = vld [vmem:[#allocation5 + $0x1f8] sm:$0xff]
    %185 = vmatpush.msra.mxu0 %v168
    %186 = vmatpush.msra.mxu0 %v167
    %187 = vmatpush.msra.mxu0 %v166
    %188 = vmatpush.msra.mxu0 %v165
    %189 = vmatpush.msra.mxu0 %v164
    %190 = vmatpush.msra.mxu0 %v163
    %191 = vmatpush.msra.mxu0 %v162
    %192 = vmatpush.msra.mxu0 %v161
    %193 = vmatpush.msra.mxu0 %v160
    %194 = vmatpush.msra.mxu0 %v159
    %195 = vmatpush.msra.mxu0 %v158
    %196 = vmatpush.msra.mxu0 %v157
    %197 = vmatpush.msra.mxu0 %v156
    %198 = vmatpush.msra.mxu0 %v155
    %199 = vmatpush.msra.mxu0 %v154
    %200 = vmatpush.msra.mxu0 %v153
    %201 = vmatmul.f32.gmra.mxu0 %v151
    %v202 = vpop.f32.mrf.mxu0
    %v203 = vadd.f32 0.0, %v202
    %204 = vdwg.mxu0
    %205 = vmatpush.msra.mxu0 %v184
    %206 = vmatpush.msra.mxu0 %v183
    %207 = vmatpush.msra.mxu0 %v182
    %208 = vmatpush.msra.mxu0 %v181
    %209 = vmatpush.msra.mxu0 %v180
    %210 = vmatpush.msra.mxu0 %v179
    %211 = vmatpush.msra.mxu0 %v178
    %212 = vmatpush.msra.mxu0 %v177
    %213 = vmatpush.msra.mxu0 %v176
    %214 = vmatpush.msra.mxu0 %v175
    %215 = vmatpush.msra.mxu0 %v174
    %216 = vmatpush.msra.mxu0 %v173
    %217 = vmatpush.msra.mxu0 %v172
    %218 = vmatpush.msra.mxu0 %v171
    %219 = vmatpush.msra.mxu0 %v170
    %220 = vmatpush.msra.mxu0 %v169
    %221 = vmatmul.f32.gmra.mxu0 %v152
    %v222 = vpop.f32.mrf.mxu0
    %v223 = vadd.f32 %v203, %v222
    %224 = vdwg.mxu0
    %225 = vmatpush.msra.mxu0 %v106
    %226 = vmatpush.msra.mxu0 %v105
    %227 = vmatpush.msra.mxu0 %v104
    %228 = vmatpush.msra.mxu0 %v103
    %229 = vmatpush.msra.mxu0 %v102
    %230 = vmatpush.msra.mxu0 %v101
    %231 = vmatpush.msra.mxu0 %v100
    %232 = vmatpush.msra.mxu0 %v99
    %233 = vmatpush.msra.mxu0 %v98
    %234 = vmatpush.msra.mxu0 %v97
    %235 = vmatpush.msra.mxu0 %v96
    %236 = vmatpush.msra.mxu0 %v95
    %237 = vmatpush.msra.mxu0 %v94
    %238 = vmatpush.msra.mxu0 %v93
    %239 = vmatpush.msra.mxu0 %v92
    %240 = vmatpush.msra.mxu0 %v91
    %241 = vmatmul.f32.gmra.mxu0 %v89
    %v242 = vpop.f32.mrf.mxu0
    %v243 = vadd.f32 %v223, %v242
    %244 = vdwg.mxu0
    %245 = vmatpush.msra.mxu0 %v122
    %246 = vmatpush.msra.mxu0 %v121
    %247 = vmatpush.msra.mxu0 %v120
    %248 = vmatpush.msra.mxu0 %v119
    %249 = vmatpush.msra.mxu0 %v118
    %250 = vmatpush.msra.mxu0 %v117
    %251 = vmatpush.msra.mxu0 %v116
    %252 = vmatpush.msra.mxu0 %v115
    %253 = vmatpush.msra.mxu0 %v114
    %254 = vmatpush.msra.mxu0 %v113
    %255 = vmatpush.msra.mxu0 %v112
    %256 = vmatpush.msra.mxu0 %v111
    %257 = vmatpush.msra.mxu0 %v110
    %258 = vmatpush.msra.mxu0 %v109
    %259 = vmatpush.msra.mxu0 %v108
    %260 = vmatpush.msra.mxu0 %v107
    %261 = vmatmul.f32.gmra.mxu0 %v90
    %v262 = vpop.f32.mrf.mxu0
    %v263 = vadd.f32 %v243, %v262
    %264 = vdwg.mxu0
    %v265 = vld [vmem:[#allocation2 + $0x8] sm:$0xf]
    %v267 = vperm.slane %v265, 0
    %v268 = vperm.slane %v265, 2
    %v271 = vperm.slane %v267, 0
    %v272 = vperm.slane %v268, 0
    %v273 = vmul.f32 %v56, %v271
    %v274 = vmul.f32 %v56, %v272
    %v275 = vperm.slane %v265, 1
    %v276 = vperm.slane %v265, 3
    %v279 = vperm.slane %v275, 1
    %v280 = vperm.slane %v276, 1
    %v281 = vmul.f32 %v69, %v279
    %v282 = vmul.f32 %v69, %v280
    %v283 = vadd.f32 %v273, %v281
    %v284 = vadd.f32 %v274, %v282
    %v285 = vld [vmem:[%s2 + $0x4] sm:$0x3]
    %v287 = vperm.slane %v285, 0
    %v288 = vperm.slane %v285, 1
    %v291 = vadd.f32 %v283, %v287
    %v292 = vadd.f32 %v284, %v288
    %v293 = vtanh.pop %v291
    %v294 = vtanh.pop %v292
    %v295 = vld [vmem:[#allocation5 + $0x200] sm:$0xff]
    %v296 = vld [vmem:[#allocation5 + $0x208] sm:$0xff]
    %v297 = vld [vmem:[#allocation5 + $0x210] sm:$0xff]
    %v298 = vld [vmem:[#allocation5 + $0x218] sm:$0xff]
    %v299 = vld [vmem:[#allocation5 + $0x220] sm:$0xff]
    %v300 = vld [vmem:[#allocation5 + $0x228] sm:$0xff]
    %v301 = vld [vmem:[#allocation5 + $0x230] sm:$0xff]
    %v302 = vld [vmem:[#allocation5 + $0x238] sm:$0xff]
    %v303 = vld [vmem:[#allocation5 + $0x240] sm:$0xff]
    %v304 = vld [vmem:[#allocation5 + $0x248] sm:$0xff]
    %v305 = vld [vmem:[#allocation5 + $0x250] sm:$0xff]
    %v306 = vld [vmem:[#allocation5 + $0x258] sm:$0xff]
    %v307 = vld [vmem:[#allocation5 + $0x260] sm:$0xff]
    %v308 = vld [vmem:[#allocation5 + $0x268] sm:$0xff]
    %v309 = vld [vmem:[#allocation5 + $0x270] sm:$0xff]
    %v310 = vld [vmem:[#allocation5 + $0x278] sm:$0xff]
    %v311 = vld [vmem:[#allocation5 + $0x280] sm:$0xff]
    %v312 = vld [vmem:[#allocation5 + $0x288] sm:$0xff]
    %v313 = vld [vmem:[#allocation5 + $0x290] sm:$0xff]
    %v314 = vld [vmem:[#allocation5 + $0x298] sm:$0xff]
    %v315 = vld [vmem:[#allocation5 + $0x2a0] sm:$0xff]
    %v316 = vld [vmem:[#allocation5 + $0x2a8] sm:$0xff]
    %v317 = vld [vmem:[#allocation5 + $0x2b0] sm:$0xff]
    %v318 = vld [vmem:[#allocation5 + $0x2b8] sm:$0xff]
    %v319 = vld [vmem:[#allocation5 + $0x2c0] sm:$0xff]
    %v320 = vld [vmem:[#allocation5 + $0x2c8] sm:$0xff]
    %v321 = vld [vmem:[#allocation5 + $0x2d0] sm:$0xff]
    %v322 = vld [vmem:[#allocation5 + $0x2d8] sm:$0xff]
    %v323 = vld [vmem:[#allocation5 + $0x2e0] sm:$0xff]
    %v324 = vld [vmem:[#allocation5 + $0x2e8] sm:$0xff]
    %v325 = vld [vmem:[#allocation5 + $0x2f0] sm:$0xff]
    %v326 = vld [vmem:[#allocation5 + $0x2f8] sm:$0xff]
    %327 = vmatpush.msra.mxu0 %v310
    %328 = vmatpush.msra.mxu0 %v309
    %329 = vmatpush.msra.mxu0 %v308
    %330 = vmatpush.msra.mxu0 %v307
    %331 = vmatpush.msra.mxu0 %v306
    %332 = vmatpush.msra.mxu0 %v305
    %333 = vmatpush.msra.mxu0 %v304
    %334 = vmatpush.msra.mxu0 %v303
    %335 = vmatpush.msra.mxu0 %v302
    %336 = vmatpush.msra.mxu0 %v301
    %337 = vmatpush.msra.mxu0 %v300
    %338 = vmatpush.msra.mxu0 %v299
    %339 = vmatpush.msra.mxu0 %v298
    %340 = vmatpush.msra.mxu0 %v297
    %341 = vmatpush.msra.mxu0 %v296
    %342 = vmatpush.msra.mxu0 %v295
    %343 = vmatmul.f32.gmra.mxu0 %v293
    %v344 = vpop.f32.mrf.mxu0
    %v345 = vadd.f32 0.0, %v344
    %346 = vdwg.mxu0
    %347 = vmatpush.msra.mxu0 %v326
    %348 = vmatpush.msra.mxu0 %v325
    %349 = vmatpush.msra.mxu0 %v324
    %350 = vmatpush.msra.mxu0 %v323
    %351 = vmatpush.msra.mxu0 %v322
    %352 = vmatpush.msra.mxu0 %v321
    %353 = vmatpush.msra.mxu0 %v320
    %354 = vmatpush.msra.mxu0 %v319
    %355 = vmatpush.msra.mxu0 %v318
    %356 = vmatpush.msra.mxu0 %v317
    %357 = vmatpush.msra.mxu0 %v316
    %358 = vmatpush.msra.mxu0 %v315
    %359 = vmatpush.msra.mxu0 %v314
    %360 = vmatpush.msra.mxu0 %v313
    %361 = vmatpush.msra.mxu0 %v312
    %362 = vmatpush.msra.mxu0 %v311
    %363 = vmatmul.f32.gmra.mxu0 %v294
    %v364 = vpop.f32.mrf.mxu0
    %v365 = vadd.f32 %v345, %v364
    %366 = vdwg.mxu0
    %v367 = vadd.f32 %v263, %v365
    %v368 = vld [vmem:[#allocation2 + $0xc] sm:$0xf]
    %v370 = vperm.slane %v368, 0
    %v371 = vperm.slane %v368, 2
    %v374 = vperm.slane %v370, 0
    %v375 = vperm.slane %v371, 0
    %v376 = vmul.f32 %v56, %v374
    %v377 = vmul.f32 %v56, %v375
    %v378 = vperm.slane %v368, 1
    %v379 = vperm.slane %v368, 3
    %v382 = vperm.slane %v378, 1
    %v383 = vperm.slane %v379, 1
    %v384 = vmul.f32 %v69, %v382
    %v385 = vmul.f32 %v69, %v383
    %v386 = vadd.f32 %v376, %v384
    %v387 = vadd.f32 %v377, %v385
    %v388 = vld [vmem:[%s2 + $0x6] sm:$0x3]
    %v390 = vperm.slane %v388, 0
    %v391 = vperm.slane %v388, 1
    %v394 = vadd.f32 %v386, %v390
    %v395 = vadd.f32 %v387, %v391
    %v396 = vtanh.pop %v394
    %v397 = vtanh.pop %v395
    %v398 = vld [vmem:[#allocation5 + $0x300] sm:$0xff]
    %v399 = vld [vmem:[#allocation5 + $0x308] sm:$0xff]
    %v400 = vld [vmem:[#allocation5 + $0x310] sm:$0xff]
    %v401 = vld [vmem:[#allocation5 + $0x318] sm:$0xff]
    %v402 = vld [vmem:[#allocation5 + $0x320] sm:$0xff]
    %v403 = vld [vmem:[#allocation5 + $0x328] sm:$0xff]
    %v404 = vld [vmem:[#allocation5 + $0x330] sm:$0xff]
    %v405 = vld [vmem:[#allocation5 + $0x338] sm:$0xff]
    %v406 = vld [vmem:[#allocation5 + $0x340] sm:$0xff]
    %v407 = vld [vmem:[#allocation5 + $0x348] sm:$0xff]
    %v408 = vld [vmem:[#allocation5 + $0x350] sm:$0xff]
    %v409 = vld [vmem:[#allocation5 + $0x358] sm:$0xff]
    %v410 = vld [vmem:[#allocation5 + $0x360] sm:$0xff]
    %v411 = vld [vmem:[#allocation5 + $0x368] sm:$0xff]
    %v412 = vld [vmem:[#allocation5 + $0x370] sm:$0xff]
    %v413 = vld [vmem:[#allocation5 + $0x378] sm:$0xff]
    %v414 = vld [vmem:[#allocation5 + $0x380] sm:$0xff]
    %v415 = vld [vmem:[#allocation5 + $0x388] sm:$0xff]
    %v416 = vld [vmem:[#allocation5 + $0x390] sm:$0xff]
    %v417 = vld [vmem:[#allocation5 + $0x398] sm:$0xff]
    %v418 = vld [vmem:[#allocation5 + $0x3a0] sm:$0xff]
    %v419 = vld [vmem:[#allocation5 + $0x3a8] sm:$0xff]
    %v420 = vld [vmem:[#allocation5 + $0x3b0] sm:$0xff]
    %v421 = vld [vmem:[#allocation5 + $0x3b8] sm:$0xff]
    %v422 = vld [vmem:[#allocation5 + $0x3c0] sm:$0xff]
    %v423 = vld [vmem:[#allocation5 + $0x3c8] sm:$0xff]
    %v424 = vld [vmem:[#allocation5 + $0x3d0] sm:$0xff]
    %v425 = vld [vmem:[#allocation5 + $0x3d8] sm:$0xff]
    %v426 = vld [vmem:[#allocation5 + $0x3e0] sm:$0xff]
    %v427 = vld [vmem:[#allocation5 + $0x3e8] sm:$0xff]
    %v428 = vld [vmem:[#allocation5 + $0x3f0] sm:$0xff]
    %v429 = vld [vmem:[#allocation5 + $0x3f8] sm:$0xff]
    %430 = vmatpush.msra.mxu0 %v413
    %431 = vmatpush.msra.mxu0 %v412
    %432 = vmatpush.msra.mxu0 %v411
    %433 = vmatpush.msra.mxu0 %v410
    %434 = vmatpush.msra.mxu0 %v409
    %435 = vmatpush.msra.mxu0 %v408
    %436 = vmatpush.msra.mxu0 %v407
    %437 = vmatpush.msra.mxu0 %v406
    %438 = vmatpush.msra.mxu0 %v405
    %439 = vmatpush.msra.mxu0 %v404
    %440 = vmatpush.msra.mxu0 %v403
    %441 = vmatpush.msra.mxu0 %v402
    %442 = vmatpush.msra.mxu0 %v401
    %443 = vmatpush.msra.mxu0 %v400
    %444 = vmatpush.msra.mxu0 %v399
    %445 = vmatpush.msra.mxu0 %v398
    %446 = vmatmul.f32.gmra.mxu0 %v396
    %v447 = vpop.f32.mrf.mxu0
    %v448 = vadd.f32 0.0, %v447
    %449 = vdwg.mxu0
    %450 = vmatpush.msra.mxu0 %v429
    %451 = vmatpush.msra.mxu0 %v428
    %452 = vmatpush.msra.mxu0 %v427
    %453 = vmatpush.msra.mxu0 %v426
    %454 = vmatpush.msra.mxu0 %v425
    %455 = vmatpush.msra.mxu0 %v424
    %456 = vmatpush.msra.mxu0 %v423
    %457 = vmatpush.msra.mxu0 %v422
    %458 = vmatpush.msra.mxu0 %v421
    %459 = vmatpush.msra.mxu0 %v420
    %460 = vmatpush.msra.mxu0 %v419
    %461 = vmatpush.msra.mxu0 %v418
    %462 = vmatpush.msra.mxu0 %v417
    %463 = vmatpush.msra.mxu0 %v416
    %464 = vmatpush.msra.mxu0 %v415
    %465 = vmatpush.msra.mxu0 %v414
    %466 = vmatmul.f32.gmra.mxu0 %v397
    %v467 = vpop.f32.mrf.mxu0
    %v468 = vadd.f32 %v448, %v467
    %469 = vdwg.mxu0
    %v470 = vadd.f32 %v367, %v468
    %v471 = vld [vmem:[%s4] sm:$0x1]
    %v473 = vperm.slane %v471, 0
    %v475 = vadd.f32 %v470, %v473
    %476 = vst [vmem:[#allocation7] sm:$0xff] %v475
    // Predicated region
    $region30: #{tpu_custom_call.1} parent=1 // pred_check
      _
    $region31: #{tpu_custom_call.1} parent=1 // pred_check_branch
      %478 = sbr.rel (0) target = $region33
    $region32: #{tpu_custom_call.1} parent=1 // pred_region
      %480 = vsyncadd [#allocation4], 0
      %s482 = sshll.u32 [#allocation7], 4
      %s483 = int_to_ptr.vmem [resolvable:$true] %s482
      %s484 = sshll.u32 %s5, 4
      %s485 = int_to_ptr.hbm [resolvable:$true] %s484
      %487 = dma.vmem_to_hbm [thread:$0]  %s483, 128, %s485, [#allocation4]
    $region33: #{tpu_custom_call.1} parent=1 // pred_fallthru
      _
    // Predicated region
    $region34: #{tpu_custom_call.1} parent=1 // pred_check
      _
    $region35: #{tpu_custom_call.1} parent=1 // pred_check_branch
      %489 = sbr.rel (0) target = $region37
    $region36: #{tpu_custom_call.1} parent=1 // pred_region
      %491 = dma.done [#allocation4], 128
    $region37: #{tpu_custom_call.1} parent=1 // pred_fallthru
      _
    %492 = vsyncpa [#allocation3], 1
    %493 = vsyncpa [#allocation6], 1
    %494 = vsyncpa [#allocation4], 1

</llo_original>
